<compile_context>
chip_gen: v5e
topology: v5e:2x2
jax: 0.10.0
libtpu: 0.0.40
codegen_flags: <defaults>
</compile_context>

<pallas_src>
import functools
import math

import numpy as np

import jax
import jax.numpy as jnp
from jax.experimental import pallas as pl
from jax.experimental.pallas import tpu as pltpu

_HALF_LOG_2PI = 0.5 * math.log(2.0 * math.pi)
_BN_EPS = 1e-5
_LANE = 128          # output slab lane width
_HID = 128           # hidden width of each tower (fused hidden = 256)


# ----------------------------------------------------------------------------
# Kernel
# ----------------------------------------------------------------------------
def _policy_kernel(A, B, flag_ref, state_ref, act_std_ref, bias_ref,
                   w1, w2, w3, w4, out_ref):
    """Fused actor+critic forward + Normal log-prob, single VMEM block.

    flag_ref    : SMEM (1,) int32  -- 1: sample (rows hold eps), 0: evaluate
    state_ref   : (B, S) f32       -- input states
    act_std_ref : (B+1, A) f32     -- rows 0..B-1: eps or actions; row B: std
    bias_ref    : (4, 256) f32     -- rows: b1 | b2 | b3 | [b4a, b4c, 0...]
    w1          : (S, 256) bf16    -- [W1_actor | W1_critic]
    w2, w3      : (256, 256) bf16  -- blockdiag(actor, critic)
    w4          : (256, A+1) bf16  -- actor rows -> cols 0..A-1, critic -> col A
    out_ref     : (B, 128) f32     -- [actions | value | logp | zeros]
    """
    f32 = jnp.float32
    bf16 = jnp.bfloat16

    def bn(x):
        # BatchNorm1d, training mode, gamma=1 / beta=0, biased variance.
        # Shifted one-pass moments: the two batch reductions overlap on the
        # XLU while the row-0 shift avoids E[x^2]-E[x]^2 cancellation.
        d = x - x[0:1, :]
        mu = jnp.mean(d, axis=0, keepdims=True)
        ex2 = jnp.mean(d * d, axis=0, keepdims=True)
        var = ex2 - mu * mu
        return (d - mu) * jax.lax.rsqrt(var + _BN_EPS)

    def layer(x, w_ref, b):
        # Single-pass bf16 MXU dot; f32 accumulation; BN math stays f32.
        return jnp.dot(bn(x).astype(bf16), w_ref[...],
                       preferred_element_type=f32) + b

    b1 = bias_ref[0:1, :]
    b2 = bias_ref[1:2, :]
    b3 = bias_ref[2:3, :]
    b4 = bias_ref[3:4, :A + 1]

    x = state_ref[...]                                    # (B, S)
    h = jnp.maximum(layer(x, w1, b1), 0.0)                # (B, 256) [actor|critic]
    h = jnp.maximum(layer(h, w2, b2), 0.0)                # (B, 256)
    h = jnp.maximum(layer(h, w3, b3), 0.0)                # (B, 256)
    y = jnp.tanh(layer(h, w4, b4))                        # (B, A+1)

    means = y[:, :A]                                      # (B, A) action means
    value = y[:, A:A + 1]                                 # (B, 1) state value

    std = act_std_ref[B:B + 1, :]                         # (1, A) clipped std
    a_in = act_std_ref[:B, :]                             # (B, A) eps / actions

    # sample?  actions = means + std*eps   else  actions = provided actions
    samp = (flag_ref[0] == 1).astype(f32)                 # scalar 0.0 / 1.0
    sampled = means + std * a_in
    actions = a_in + samp * (sampled - a_in)

    # Normal(means, std).log_prob(actions), summed over the A action lanes.
    diff = actions - means
    inv2v = 0.5 * pl.reciprocal(std * std, approx=True)   # EUP slot
    logp_terms = -(diff * diff) * inv2v - jnp.log(std) - _HALF_LOG_2PI
    logp = jnp.sum(logp_terms, axis=1, keepdims=True)     # (B, 1)

    # Lane-dense (B, 128) output slab: actions | value | logp | zeros.
    out_ref[...] = jnp.zeros_like(out_ref)
    out_ref[:, :A] = actions
    out_ref[:, A:A + 1] = value
    out_ref[:, A + 1:A + 2] = logp


# ----------------------------------------------------------------------------
# Parameters
# ----------------------------------------------------------------------------
def make_params(state_size, action_size, key):
    """Synthetic init mirroring the PyTorch reset_parameters(); per-tower."""
    ks = jax.random.split(key, 16)

    def linear(kw, kb, fan_in, fan_out, w_limit):
        # weight stored transposed: (in, out)
        w = jax.random.uniform(kw, (fan_in, fan_out), jnp.float32,
                               -w_limit, w_limit)
        b_lim = 1.0 / math.sqrt(fan_in)            # PyTorch default bias init
        b = jax.random.uniform(kb, (1, fan_out), jnp.float32, -b_lim, b_lim)
        return w, b

    hid_lim = 1.0 / math.sqrt(float(_HID))         # hidden_init -> out_features

    wa1, ba1 = linear(ks[0], ks[1], state_size, _HID, hid_lim)
    wa2, ba2 = linear(ks[2], ks[3], _HID, _HID, hid_lim)
    wa3, ba3 = linear(ks[4], ks[5], _HID, _HID, hid_lim)
    wa4, ba4 = linear(ks[6], ks[7], _HID, action_size, 0.003)

    wc1, bc1 = linear(ks[8], ks[9], state_size, _HID, hid_lim)
    wc2, bc2 = linear(ks[10], ks[11], _HID, _HID, hid_lim)
    wc3, bc3 = linear(ks[12], ks[13], _HID, _HID, hid_lim)
    wc4, bc4 = linear(ks[14], ks[15], _HID, 1, 0.003)

    action_std = jnp.full((1, action_size), 0.15, jnp.float32)

    return (wa1, ba1, wa2, ba2, wa3, ba3, wa4, ba4,
            wc1, bc1, wc2, bc2, wc3, bc3, wc4, bc4,
            action_std)


def pack_params(raw):
    """Fuse the two towers; store weights bf16, biases packed in one array."""
    (wa1, ba1, wa2, ba2, wa3, ba3, wa4, ba4,
     wc1, bc1, wc2, bc2, wc3, bc3, wc4, bc4, action_std) = raw
    A = action_std.shape[-1]
    assert A + 2 <= _LANE, "action_size too large for the 128-lane output slab"
    f32, bf16 = jnp.float32, jnp.bfloat16

    def blkdiag(a, c):
        top = jnp.concatenate([a, jnp.zeros((a.shape[0], c.shape[1]), f32)], 1)
        bot = jnp.concatenate([jnp.zeros((c.shape[0], a.shape[1]), f32), c], 1)
        return jnp.concatenate([top, bot], 0)

    w1 = jnp.concatenate([wa1, wc1], axis=1).astype(bf16)   # (S, 256)
    w2 = blkdiag(wa2, wc2).astype(bf16)                     # (256, 256)
    w3 = blkdiag(wa3, wc3).astype(bf16)                     # (256, 256)

    # Layer 4 without zero-lane padding: (256, A+1).
    w4 = jnp.zeros((2 * _HID, A + 1), f32)
    w4 = w4.at[:_HID, :A].set(wa4)
    w4 = w4.at[_HID:, A:A + 1].set(wc4)
    w4 = w4.astype(bf16)

    # All biases in one (4, 256) f32 array (kept f32: added post-accumulation).
    bias = jnp.zeros((4, 2 * _HID), f32)
    bias = bias.at[0:1, :].set(jnp.concatenate([ba1, bc1], axis=1))
    bias = bias.at[1:2, :].set(jnp.concatenate([ba2, bc2], axis=1))
    bias = bias.at[2:3, :].set(jnp.concatenate([ba3, bc3], axis=1))
    bias = bias.at[3:4, :A].set(ba4)
    bias = bias.at[3:4, A:A + 1].set(bc4)

    return dict(w1=w1, w2=w2, w3=w3, w4=w4, bias=bias,
                action_std=action_std, A=A)


# ----------------------------------------------------------------------------
# Wrapper (mirrors PolicyNetwork.forward(states, actions, scale))
# ----------------------------------------------------------------------------
def policy_forward(packed, states, actions=None, scale=1.0, key=None):
    A = packed["A"]
    B, S = states.shape
    f32 = jnp.float32

    sampling = actions is None
    if sampling:
        if key is None:
            key = jax.random.PRNGKey(0)
        act_core = jax.random.normal(key, (B, A), f32)     # eps ~ N(0,1)
    else:
        act_core = actions.astype(f32)

    # F.hardtanh(action_std, 0.06*scale, 0.6*scale): parameter-only, wrapper-side.
    std_clip = jnp.clip(packed["action_std"].astype(f32), 0.06 * scale, 0.6 * scale)

    # Fold std into the action/eps slab as the last row -> one fewer DMA.
    act_std = jnp.concatenate([act_core, std_clip], axis=0)   # (B+1, A)

    flag = jnp.array([1 if sampling else 0], jnp.int32)

    kernel = functools.partial(_policy_kernel, A, B)
    vmem = pl.BlockSpec(memory_space=pltpu.MemorySpace.VMEM)
    smem = pl.BlockSpec(memory_space=pltpu.MemorySpace.SMEM)

    H2 = 2 * _HID
    flops = 2 * B * (S * H2 + 2 * H2 * H2 + H2 * (A + 1))
    transcendentals = B * (A + 1) + (S + 3 * H2) + A
    bytes_accessed = (B * S * 4 + (B + 1) * A * 4 + 4 * H2 * 4
                      + S * H2 * 2 + 2 * H2 * H2 * 2 + H2 * (A + 1) * 2
                      + B * _LANE * 4)

    slab = pl.pallas_call(
        kernel,
        out_shape=jax.ShapeDtypeStruct((B, _LANE), f32),
        in_specs=[smem] + [vmem] * 7,
        out_specs=vmem,
        cost_estimate=pl.CostEstimate(flops=flops,
                                      transcendentals=transcendentals,
                                      bytes_accessed=bytes_accessed),
    )(flag, states.astype(f32), act_std, packed["bias"],
      packed["w1"], packed["w2"], packed["w3"], packed["w4"])

    actions_out = slab[:, :A]                   # (B, A)
    values = slab[:, A:A + 1]                   # (B, 1)
    log_probs = slab[:, A + 1:A + 2]            # (B, 1)

    # dist.entropy().mean() depends only on std -> parameter-only wrapper math.
    entropy = jnp.mean(0.5 + _HALF_LOG_2PI + jnp.log(std_clip))

    return actions_out, log_probs, values, entropy


# ----------------------------------------------------------------------------
# Pure-JAX reference (two separate f32 towers, two-pass BN) for correctness
# ----------------------------------------------------------------------------
def _reference_forward(raw, states, actions, scale):
    (wa1, ba1, wa2, ba2, wa3, ba3, wa4, ba4,
     wc1, bc1, wc2, bc2, wc3, bc3, wc4, bc4, action_std) = raw
    dot = functools.partial(jnp.dot, precision=jax.lax.Precision.HIGHEST)

    def bn(x):
        mu = jnp.mean(x, axis=0, keepdims=True)
        var = jnp.mean((x - mu) ** 2, axis=0, keepdims=True)
        return (x - mu) / jnp.sqrt(var + _BN_EPS)

    def tower(x, w1, b1, w2, b2, w3, b3, w4, b4):
        h = jax.nn.relu(dot(bn(x), w1) + b1)
        h = jax.nn.relu(dot(bn(h), w2) + b2)
        h = jax.nn.relu(dot(bn(h), w3) + b3)
        return jnp.tanh(dot(bn(h), w4) + b4)

    means = tower(states, wa1, ba1, wa2, ba2, wa3, ba3, wa4, ba4)
    values = tower(states, wc1, bc1, wc2, bc2, wc3, bc3, wc4, bc4)
    std = jnp.clip(action_std, 0.06 * scale, 0.6 * scale)
    logp = jnp.sum(-((actions - means) ** 2) / (2.0 * std * std)
                   - jnp.log(std) - _HALF_LOG_2PI, axis=1, keepdims=True)
    ent = jnp.mean(0.5 + _HALF_LOG_2PI + jnp.log(std))
    return actions, logp, values, ent


# ----------------------------------------------------------------------------
if __name__ == "__main__":
    key = jax.random.PRNGKey(0)
    k_params, k_states, k_eps, k_act = jax.random.split(key, 4)

    state_size, action_size, batch = 32, 8, 8
    raw = make_params(state_size, action_size, k_params)
    packed = pack_params(raw)
    states = jax.random.normal(k_states, (batch, state_size), jnp.float32)

    # Path 1: actions=None (sampling) — the default PyTorch call.
    actions, log_probs, values, entropy = policy_forward(
        packed, states, actions=None, scale=1.0, key=k_eps)
    jax.block_until_ready((actions, log_probs, values, entropy))
    assert actions.shape == (batch, action_size)
    assert log_probs.shape == (batch, 1)
    assert values.shape == (batch, 1)
    assert entropy.shape == ()
    assert bool(jnp.all(jnp.isfinite(actions)))
    assert bool(jnp.all(jnp.isfinite(log_probs)))
    assert bool(jnp.all(jnp.isfinite(values)))

    # Path 2: actions provided (log-prob evaluation) — check vs pure-JAX ref.
    given = 0.3 * jax.random.normal(k_act, (batch, action_size), jnp.float32)
    a2, lp2, v2, ent2 = policy_forward(packed, states, actions=given, scale=1.0)
    jax.block_until_ready((a2, lp2, v2, ent2))

    ra, rlp, rv, rent = _reference_forward(raw, states, given, 1.0)
    # bf16 weight/MXU path -> tolerance-equivalent (not bit-for-bit) vs f32 ref.
    np.testing.assert_allclose(np.asarray(a2), np.asarray(ra), rtol=2e-2, atol=2e-2)
    np.testing.assert_allclose(np.asarray(lp2), np.asarray(rlp), rtol=2e-2, atol=2e-2)
    np.testing.assert_allclose(np.asarray(v2), np.asarray(rv), rtol=2e-2, atol=2e-2)
    np.testing.assert_allclose(np.asarray(ent2), np.asarray(rent), rtol=2e-2, atol=2e-2)

    print("KERNEL_OK")
</pallas_src>

<mosaic_0001>
module attributes {stable_mosaic.version = 11 : i64} {
  func.func @_policy_kernel(%arg0: memref<1xi32, #tpu.memory_space<smem>>, %arg1: memref<8x32xf32, #tpu.memory_space<vmem>>, %arg2: memref<9x8xf32, #tpu.memory_space<vmem>>, %arg3: memref<4x256xf32, #tpu.memory_space<vmem>>, %arg4: memref<32x256xbf16, #tpu.memory_space<vmem>>, %arg5: memref<256x256xbf16, #tpu.memory_space<vmem>>, %arg6: memref<256x256xbf16, #tpu.memory_space<vmem>>, %arg7: memref<256x9xbf16, #tpu.memory_space<vmem>>, %arg8: memref<8x128xf32, #tpu.memory_space<vmem>>) attributes {dimension_semantics = [], scalar_prefetch = 0 : i64, scratch_operands = 0 : i64, tpu.core_type = #tpu.core_type<tc>} {
    %c0 = arith.constant 0 : index
    %c0_0 = arith.constant 0 : index
    %0 = vector.load %arg3[%c0, %c0_0] : memref<4x256xf32, #tpu.memory_space<vmem>>, vector<1x256xf32>
    %c1 = arith.constant 1 : index
    %c0_1 = arith.constant 0 : index
    %1 = vector.load %arg3[%c1, %c0_1] : memref<4x256xf32, #tpu.memory_space<vmem>>, vector<1x256xf32>
    %c2 = arith.constant 2 : index
    %c0_2 = arith.constant 0 : index
    %2 = vector.load %arg3[%c2, %c0_2] : memref<4x256xf32, #tpu.memory_space<vmem>>, vector<1x256xf32>
    %c3 = arith.constant 3 : index
    %c0_3 = arith.constant 0 : index
    %3 = vector.load %arg3[%c3, %c0_3] : memref<4x256xf32, #tpu.memory_space<vmem>>, vector<1x9xf32>
    %c0_4 = arith.constant 0 : index
    %c0_5 = arith.constant 0 : index
    %4 = vector.load %arg1[%c0_4, %c0_5] : memref<8x32xf32, #tpu.memory_space<vmem>>, vector<8x32xf32>
    %5 = vector.extract_strided_slice %4 {offsets = [0, 0], sizes = [1, 32], strides = [1, 1]} : vector<8x32xf32> to vector<1x32xf32>
    %6 = vector.broadcast %5 : vector<1x32xf32> to vector<8x32xf32>
    %7 = arith.subf %4, %6 : vector<8x32xf32>
    %cst = arith.constant dense<0.000000e+00> : vector<32xf32>
    %8 = vector.multi_reduction <add>, %7, %cst [0] : vector<8x32xf32> to vector<32xf32>
    %9 = vector.shape_cast %8 : vector<32xf32> to vector<1x32xf32>
    %cst_6 = arith.constant 8.000000e+00 : f32
    %10 = vector.broadcast %cst_6 : f32 to vector<1x32xf32>
    %11 = arith.divf %9, %10 : vector<1x32xf32>
    %12 = arith.mulf %7, %7 : vector<8x32xf32>
    %cst_7 = arith.constant dense<0.000000e+00> : vector<32xf32>
    %13 = vector.multi_reduction <add>, %12, %cst_7 [0] : vector<8x32xf32> to vector<32xf32>
    %14 = vector.shape_cast %13 : vector<32xf32> to vector<1x32xf32>
    %cst_8 = arith.constant 8.000000e+00 : f32
    %15 = vector.broadcast %cst_8 : f32 to vector<1x32xf32>
    %16 = arith.divf %14, %15 : vector<1x32xf32>
    %17 = arith.mulf %11, %11 : vector<1x32xf32>
    %18 = arith.subf %16, %17 : vector<1x32xf32>
    %19 = vector.broadcast %11 : vector<1x32xf32> to vector<8x32xf32>
    %20 = arith.subf %7, %19 : vector<8x32xf32>
    %cst_9 = arith.constant 9.99999974E-6 : f32
    %21 = vector.broadcast %cst_9 : f32 to vector<1x32xf32>
    %22 = arith.addf %18, %21 : vector<1x32xf32>
    %23 = math.rsqrt %22 : vector<1x32xf32>
    %24 = vector.broadcast %23 : vector<1x32xf32> to vector<8x32xf32>
    %25 = arith.mulf %20, %24 : vector<8x32xf32>
    %26 = arith.truncf %25 : vector<8x32xf32> to vector<8x32xbf16>
    %c0_10 = arith.constant 0 : index
    %c0_11 = arith.constant 0 : index
    %27 = vector.load %arg4[%c0_10, %c0_11] : memref<32x256xbf16, #tpu.memory_space<vmem>>, vector<32x256xbf16>
    %cst_12 = arith.constant dense<0.000000e+00> : vector<8x256xf32>
    %28 = tpu.matmul %26, %27, %cst_12 {dimension_numbers = #tpu.dot_dimension_numbers<[1], [0], [0], [1], [0, 0, 1, 1], [], []>} : vector<8x32xbf16>, vector<32x256xbf16>, vector<8x256xf32> -> vector<8x256xf32>
    %29 = vector.broadcast %0 : vector<1x256xf32> to vector<8x256xf32>
    %30 = arith.addf %28, %29 : vector<8x256xf32>
    %cst_13 = arith.constant 0.000000e+00 : f32
    %31 = vector.broadcast %cst_13 : f32 to vector<8x256xf32>
    %32 = arith.maximumf %30, %31 : vector<8x256xf32>
    %33 = vector.extract_strided_slice %32 {offsets = [0, 0], sizes = [1, 256], strides = [1, 1]} : vector<8x256xf32> to vector<1x256xf32>
    %34 = vector.broadcast %33 : vector<1x256xf32> to vector<8x256xf32>
    %35 = arith.subf %32, %34 : vector<8x256xf32>
    %cst_14 = arith.constant dense<0.000000e+00> : vector<256xf32>
    %36 = vector.multi_reduction <add>, %35, %cst_14 [0] : vector<8x256xf32> to vector<256xf32>
    %37 = vector.shape_cast %36 : vector<256xf32> to vector<1x256xf32>
    %cst_15 = arith.constant 8.000000e+00 : f32
    %38 = vector.broadcast %cst_15 : f32 to vector<1x256xf32>
    %39 = arith.divf %37, %38 : vector<1x256xf32>
    %40 = arith.mulf %35, %35 : vector<8x256xf32>
    %cst_16 = arith.constant dense<0.000000e+00> : vector<256xf32>
    %41 = vector.multi_reduction <add>, %40, %cst_16 [0] : vector<8x256xf32> to vector<256xf32>
    %42 = vector.shape_cast %41 : vector<256xf32> to vector<1x256xf32>
    %cst_17 = arith.constant 8.000000e+00 : f32
    %43 = vector.broadcast %cst_17 : f32 to vector<1x256xf32>
    %44 = arith.divf %42, %43 : vector<1x256xf32>
    %45 = arith.mulf %39, %39 : vector<1x256xf32>
    %46 = arith.subf %44, %45 : vector<1x256xf32>
    %47 = vector.broadcast %39 : vector<1x256xf32> to vector<8x256xf32>
    %48 = arith.subf %35, %47 : vector<8x256xf32>
    %cst_18 = arith.constant 9.99999974E-6 : f32
    %49 = vector.broadcast %cst_18 : f32 to vector<1x256xf32>
    %50 = arith.addf %46, %49 : vector<1x256xf32>
    %51 = math.rsqrt %50 : vector<1x256xf32>
    %52 = vector.broadcast %51 : vector<1x256xf32> to vector<8x256xf32>
    %53 = arith.mulf %48, %52 : vector<8x256xf32>
    %54 = arith.truncf %53 : vector<8x256xf32> to vector<8x256xbf16>
    %c0_19 = arith.constant 0 : index
    %c0_20 = arith.constant 0 : index
    %55 = vector.load %arg5[%c0_19, %c0_20] : memref<256x256xbf16, #tpu.memory_space<vmem>>, vector<256x256xbf16>
    %cst_21 = arith.constant dense<0.000000e+00> : vector<8x256xf32>
    %56 = tpu.matmul %54, %55, %cst_21 {dimension_numbers = #tpu.dot_dimension_numbers<[1], [0], [0], [1], [0, 0, 1, 1], [], []>} : vector<8x256xbf16>, vector<256x256xbf16>, vector<8x256xf32> -> vector<8x256xf32>
    %57 = vector.broadcast %1 : vector<1x256xf32> to vector<8x256xf32>
    %58 = arith.addf %56, %57 : vector<8x256xf32>
    %cst_22 = arith.constant 0.000000e+00 : f32
    %59 = vector.broadcast %cst_22 : f32 to vector<8x256xf32>
    %60 = arith.maximumf %58, %59 : vector<8x256xf32>
    %61 = vector.extract_strided_slice %60 {offsets = [0, 0], sizes = [1, 256], strides = [1, 1]} : vector<8x256xf32> to vector<1x256xf32>
    %62 = vector.broadcast %61 : vector<1x256xf32> to vector<8x256xf32>
    %63 = arith.subf %60, %62 : vector<8x256xf32>
    %cst_23 = arith.constant dense<0.000000e+00> : vector<256xf32>
    %64 = vector.multi_reduction <add>, %63, %cst_23 [0] : vector<8x256xf32> to vector<256xf32>
    %65 = vector.shape_cast %64 : vector<256xf32> to vector<1x256xf32>
    %cst_24 = arith.constant 8.000000e+00 : f32
    %66 = vector.broadcast %cst_24 : f32 to vector<1x256xf32>
    %67 = arith.divf %65, %66 : vector<1x256xf32>
    %68 = arith.mulf %63, %63 : vector<8x256xf32>
    %cst_25 = arith.constant dense<0.000000e+00> : vector<256xf32>
    %69 = vector.multi_reduction <add>, %68, %cst_25 [0] : vector<8x256xf32> to vector<256xf32>
    %70 = vector.shape_cast %69 : vector<256xf32> to vector<1x256xf32>
    %cst_26 = arith.constant 8.000000e+00 : f32
    %71 = vector.broadcast %cst_26 : f32 to vector<1x256xf32>
    %72 = arith.divf %70, %71 : vector<1x256xf32>
    %73 = arith.mulf %67, %67 : vector<1x256xf32>
    %74 = arith.subf %72, %73 : vector<1x256xf32>
    %75 = vector.broadcast %67 : vector<1x256xf32> to vector<8x256xf32>
    %76 = arith.subf %63, %75 : vector<8x256xf32>
    %cst_27 = arith.constant 9.99999974E-6 : f32
    %77 = vector.broadcast %cst_27 : f32 to vector<1x256xf32>
    %78 = arith.addf %74, %77 : vector<1x256xf32>
    %79 = math.rsqrt %78 : vector<1x256xf32>
    %80 = vector.broadcast %79 : vector<1x256xf32> to vector<8x256xf32>
    %81 = arith.mulf %76, %80 : vector<8x256xf32>
    %82 = arith.truncf %81 : vector<8x256xf32> to vector<8x256xbf16>
    %c0_28 = arith.constant 0 : index
    %c0_29 = arith.constant 0 : index
    %83 = vector.load %arg6[%c0_28, %c0_29] : memref<256x256xbf16, #tpu.memory_space<vmem>>, vector<256x256xbf16>
    %cst_30 = arith.constant dense<0.000000e+00> : vector<8x256xf32>
    %84 = tpu.matmul %82, %83, %cst_30 {dimension_numbers = #tpu.dot_dimension_numbers<[1], [0], [0], [1], [0, 0, 1, 1], [], []>} : vector<8x256xbf16>, vector<256x256xbf16>, vector<8x256xf32> -> vector<8x256xf32>
    %85 = vector.broadcast %2 : vector<1x256xf32> to vector<8x256xf32>
    %86 = arith.addf %84, %85 : vector<8x256xf32>
    %cst_31 = arith.constant 0.000000e+00 : f32
    %87 = vector.broadcast %cst_31 : f32 to vector<8x256xf32>
    %88 = arith.maximumf %86, %87 : vector<8x256xf32>
    %89 = vector.extract_strided_slice %88 {offsets = [0, 0], sizes = [1, 256], strides = [1, 1]} : vector<8x256xf32> to vector<1x256xf32>
    %90 = vector.broadcast %89 : vector<1x256xf32> to vector<8x256xf32>
    %91 = arith.subf %88, %90 : vector<8x256xf32>
    %cst_32 = arith.constant dense<0.000000e+00> : vector<256xf32>
    %92 = vector.multi_reduction <add>, %91, %cst_32 [0] : vector<8x256xf32> to vector<256xf32>
    %93 = vector.shape_cast %92 : vector<256xf32> to vector<1x256xf32>
    %cst_33 = arith.constant 8.000000e+00 : f32
    %94 = vector.broadcast %cst_33 : f32 to vector<1x256xf32>
    %95 = arith.divf %93, %94 : vector<1x256xf32>
    %96 = arith.mulf %91, %91 : vector<8x256xf32>
    %cst_34 = arith.constant dense<0.000000e+00> : vector<256xf32>
    %97 = vector.multi_reduction <add>, %96, %cst_34 [0] : vector<8x256xf32> to vector<256xf32>
    %98 = vector.shape_cast %97 : vector<256xf32> to vector<1x256xf32>
    %cst_35 = arith.constant 8.000000e+00 : f32
    %99 = vector.broadcast %cst_35 : f32 to vector<1x256xf32>
    %100 = arith.divf %98, %99 : vector<1x256xf32>
    %101 = arith.mulf %95, %95 : vector<1x256xf32>
    %102 = arith.subf %100, %101 : vector<1x256xf32>
    %103 = vector.broadcast %95 : vector<1x256xf32> to vector<8x256xf32>
    %104 = arith.subf %91, %103 : vector<8x256xf32>
    %cst_36 = arith.constant 9.99999974E-6 : f32
    %105 = vector.broadcast %cst_36 : f32 to vector<1x256xf32>
    %106 = arith.addf %102, %105 : vector<1x256xf32>
    %107 = math.rsqrt %106 : vector<1x256xf32>
    %108 = vector.broadcast %107 : vector<1x256xf32> to vector<8x256xf32>
    %109 = arith.mulf %104, %108 : vector<8x256xf32>
    %110 = arith.truncf %109 : vector<8x256xf32> to vector<8x256xbf16>
    %c0_37 = arith.constant 0 : index
    %c0_38 = arith.constant 0 : index
    %111 = vector.load %arg7[%c0_37, %c0_38] : memref<256x9xbf16, #tpu.memory_space<vmem>>, vector<256x9xbf16>
    %cst_39 = arith.constant dense<0.000000e+00> : vector<8x9xf32>
    %112 = tpu.matmul %110, %111, %cst_39 {dimension_numbers = #tpu.dot_dimension_numbers<[1], [0], [0], [1], [0, 0, 1, 1], [], []>} : vector<8x256xbf16>, vector<256x9xbf16>, vector<8x9xf32> -> vector<8x9xf32>
    %113 = vector.broadcast %3 : vector<1x9xf32> to vector<8x9xf32>
    %114 = arith.addf %112, %113 : vector<8x9xf32>
    %115 = math.tanh %114 : vector<8x9xf32>
    %116 = vector.extract_strided_slice %115 {offsets = [0, 0], sizes = [8, 8], strides = [1, 1]} : vector<8x9xf32> to vector<8x8xf32>
    %117 = vector.extract_strided_slice %115 {offsets = [0, 8], sizes = [8, 1], strides = [1, 1]} : vector<8x9xf32> to vector<8x1xf32>
    %c8 = arith.constant 8 : index
    %c0_40 = arith.constant 0 : index
    %118 = vector.load %arg2[%c8, %c0_40] : memref<9x8xf32, #tpu.memory_space<vmem>>, vector<1x8xf32>
    %c0_41 = arith.constant 0 : index
    %c0_42 = arith.constant 0 : index
    %119 = vector.load %arg2[%c0_41, %c0_42] : memref<9x8xf32, #tpu.memory_space<vmem>>, vector<8x8xf32>
    %c0_43 = arith.constant 0 : index
    %120 = memref.load %arg0[%c0_43] : memref<1xi32, #tpu.memory_space<smem>>
    %c1_i32 = arith.constant 1 : i32
    %121 = arith.cmpi eq, %120, %c1_i32 : i32
    %122 = arith.extui %121 : i1 to i32
    %123 = arith.sitofp %122 : i32 to f32
    %124 = vector.broadcast %118 : vector<1x8xf32> to vector<8x8xf32>
    %125 = arith.mulf %124, %119 : vector<8x8xf32>
    %126 = arith.addf %116, %125 : vector<8x8xf32>
    %127 = arith.subf %126, %119 : vector<8x8xf32>
    %128 = vector.broadcast %123 : f32 to vector<8x8xf32>
    %129 = arith.mulf %128, %127 : vector<8x8xf32>
    %130 = arith.addf %119, %129 : vector<8x8xf32>
    %131 = arith.subf %130, %116 : vector<8x8xf32>
    %132 = arith.mulf %118, %118 : vector<1x8xf32>
    %133 = tpu.reciprocal %132 {approx = true} : vector<1x8xf32> -> vector<1x8xf32>
    %cst_44 = arith.constant 5.000000e-01 : f32
    %134 = vector.broadcast %cst_44 : f32 to vector<1x8xf32>
    %135 = arith.mulf %134, %133 : vector<1x8xf32>
    %136 = arith.mulf %131, %131 : vector<8x8xf32>
    %cst_45 = arith.constant 0.000000e+00 : f32
    %137 = vector.broadcast %cst_45 : f32 to vector<8x8xf32>
    %138 = arith.subf %137, %136 : vector<8x8xf32>
    %139 = vector.broadcast %135 : vector<1x8xf32> to vector<8x8xf32>
    %140 = arith.mulf %138, %139 : vector<8x8xf32>
    %141 = math.log %118 : vector<1x8xf32>
    %142 = vector.broadcast %141 : vector<1x8xf32> to vector<8x8xf32>
    %143 = arith.subf %140, %142 : vector<8x8xf32>
    %cst_46 = arith.constant 0.918938517 : f32
    %144 = vector.broadcast %cst_46 : f32 to vector<8x8xf32>
    %145 = arith.subf %143, %144 : vector<8x8xf32>
    %cst_47 = arith.constant dense<0.000000e+00> : vector<8xf32>
    %146 = vector.multi_reduction <add>, %145, %cst_47 [1] : vector<8x8xf32> to vector<8xf32>
    %147 = vector.shape_cast %146 : vector<8xf32> to vector<8x1xf32>
    %cst_48 = arith.constant 0.000000e+00 : f32
    %148 = vector.broadcast %cst_48 : f32 to vector<8x128xf32>
    %c0_49 = arith.constant 0 : index
    %c0_50 = arith.constant 0 : index
    %149 = vector.load %arg8[%c0_49, %c0_50] : memref<8x128xf32, #tpu.memory_space<vmem>>, vector<8x128xf32>
    tpu.vector_store %arg8[%c0_49, %c0_50], %148 {strides = array<i32>} : memref<8x128xf32, #tpu.memory_space<vmem>>, vector<8x128xf32>,
    %c0_51 = arith.constant 0 : index
    %c0_52 = arith.constant 0 : index
    %150 = vector.load %arg8[%c0_51, %c0_52] : memref<8x128xf32, #tpu.memory_space<vmem>>, vector<8x8xf32>
    tpu.vector_store %arg8[%c0_51, %c0_52], %130 {strides = array<i32>} : memref<8x128xf32, #tpu.memory_space<vmem>>, vector<8x8xf32>,
    %c0_53 = arith.constant 0 : index
    %c8_54 = arith.constant 8 : index
    %151 = vector.load %arg8[%c0_53, %c8_54] : memref<8x128xf32, #tpu.memory_space<vmem>>, vector<8x1xf32>
    tpu.vector_store %arg8[%c0_53, %c8_54], %117 {strides = array<i32>} : memref<8x128xf32, #tpu.memory_space<vmem>>, vector<8x1xf32>,
    %c0_55 = arith.constant 0 : index
    %c9 = arith.constant 9 : index
    %152 = vector.load %arg8[%c0_55, %c9] : memref<8x128xf32, #tpu.memory_space<vmem>>, vector<8x1xf32>
    tpu.vector_store %arg8[%c0_55, %c9], %147 {strides = array<i32>} : memref<8x128xf32, #tpu.memory_space<vmem>>, vector<8x1xf32>,
    return
  }
}

</mosaic_0001>

<llo_original>
// kernel: tpu_custom_call.1
$region0: #{tpu_custom_call.1}
  #allocation0 [shape = 'u32[]', space=smem, size = 0x4, offset = 0x4, fixed_abs, tag = 'smem constant byte address 0x4 - core index']
  #allocation1 [shape = 'u32[72,128]{1,0:T(1,128)}', space=vmem, size = 0x9000, scoped, tag = 'internal scratch']
  #allocation2 [shape = 's32[1]{0:T(128)S(6)}', space=smem, size = 0x200, scoped, tag = 'scoped memory for tpu_custom_call.1']
  %s0 = inlined_call_operand.<no memory space> [shape: s32[1], index: 0, kind: input, shape index: {}]
  %s1 = inlined_call_operand.vmem [shape: f32[8,32], index: 1, kind: input, shape index: {}]
  %s2 = inlined_call_operand.vmem [shape: f32[9,8], index: 2, kind: input, shape index: {}]
  %s3 = inlined_call_operand.vmem [shape: f32[4,256], index: 3, kind: input, shape index: {}]
  %s4 = inlined_call_operand.vmem [shape: bf16[32,256], index: 4, kind: input, shape index: {}]
  %s5 = inlined_call_operand.hbm [shape: bf16[256,256], index: 5, kind: input, shape index: {}]
  %s6 = inlined_call_operand.hbm [shape: bf16[256,256], index: 6, kind: input, shape index: {}]
  %s7 = inlined_call_operand.vmem [shape: bf16[256,9], index: 7, kind: input, shape index: {}]
  %s8 = inlined_call_operand.hbm [shape: f32[8,128], index: 8, kind: output, shape index: {}]
  %s9 = sld [smem:[#allocation0]]
  $region50: #{tpu_custom_call.1} parent=0
    _
  %s11 = ssub.s32 1, %s9
  %s12 = scalar_select 0, %s11, %s9
  %13 = sst [smem:[#allocation2]] %s0
  $region1: #{tpu_custom_call.1} parent=0
    #allocation3 [shape = 'u8[131072]{0}', space=vmem, size = 0x20000, scoped, tag = 'input window, operand 5, single buffered']
    #allocation4 [shape = 's32[1]{0}', space=sflag, size = 0x4, scoped, tag = 'scoped memory for tpu_custom_call.1']
    #allocation5 [shape = 's32[1]{0}', space=sflag, size = 0x4, scoped, tag = 'scoped memory for tpu_custom_call.1']
    #allocation6 [shape = 'u8[131072]{0}', space=vmem, size = 0x20000, scoped, tag = 'input window, operand 6, single buffered']
    #allocation7 [shape = 's32[1]{0}', space=sflag, size = 0x4, scoped, tag = 'scoped memory for tpu_custom_call.1']
    #allocation8 [shape = 'u8[4096]{0}', space=vmem, size = 0x1000, scoped, tag = 'output window, operand 0, single buffered']
    %14 = vsyncpa [#allocation4], 0
    %15 = vsyncpa [#allocation7], 0
    %16 = vsyncpa [#allocation5], 0
    // Predicated region
    $region2: #{tpu_custom_call.1} parent=1 // pred_check
      _
    $region3: #{tpu_custom_call.1} parent=1 // pred_check_branch
      %18 = sbr.rel (0) target = $region5
    $region4: #{tpu_custom_call.1} parent=1 // pred_region
      _
    $region5: #{tpu_custom_call.1} parent=1 // pred_fallthru
      _
    // Predicated region
    $region6: #{tpu_custom_call.1} parent=1 // pred_check
      _
    $region7: #{tpu_custom_call.1} parent=1 // pred_check_branch
      %20 = sbr.rel (0) target = $region9
    $region8: #{tpu_custom_call.1} parent=1 // pred_region
      _
    $region9: #{tpu_custom_call.1} parent=1 // pred_fallthru
      _
    // Predicated region
    $region10: #{tpu_custom_call.1} parent=1 // pred_check
      _
    $region11: #{tpu_custom_call.1} parent=1 // pred_check_branch
      %22 = sbr.rel (0) target = $region13
    $region12: #{tpu_custom_call.1} parent=1 // pred_region
      _
    $region13: #{tpu_custom_call.1} parent=1 // pred_fallthru
      _
    // Predicated region
    $region14: #{tpu_custom_call.1} parent=1 // pred_check
      _
    $region15: #{tpu_custom_call.1} parent=1 // pred_check_branch
      %24 = sbr.rel (0) target = $region17
    $region16: #{tpu_custom_call.1} parent=1 // pred_region
      _
    $region17: #{tpu_custom_call.1} parent=1 // pred_fallthru
      _
    // Predicated region
    $region18: #{tpu_custom_call.1} parent=1 // pred_check
      _
    $region19: #{tpu_custom_call.1} parent=1 // pred_check_branch
      %26 = sbr.rel (0) target = $region21
    $region20: #{tpu_custom_call.1} parent=1 // pred_region
      _
    $region21: #{tpu_custom_call.1} parent=1 // pred_fallthru
      _
    // Predicated region
    $region22: #{tpu_custom_call.1} parent=1 // pred_check
      _
    $region23: #{tpu_custom_call.1} parent=1 // pred_check_branch
      %28 = sbr.rel (0) target = $region25
    $region24: #{tpu_custom_call.1} parent=1 // pred_region
      %30 = vsyncadd [#allocation4], 0
      %s31 = sshll.u32 %s5, 4
      %s32 = int_to_ptr.hbm [resolvable:$true] %s31
      %s33 = sshll.u32 [#allocation3], 4
      %s34 = int_to_ptr.vmem [resolvable:$true] %s33
      %39 = dma.hbm_to_vmem [thread:$0]  %s32, 4096, %s34, [#allocation4], 128, 128, 8
    $region25: #{tpu_custom_call.1} parent=1 // pred_fallthru
      _
    // Predicated region
    $region26: #{tpu_custom_call.1} parent=1 // pred_check
      _
    $region27: #{tpu_custom_call.1} parent=1 // pred_check_branch
      %41 = sbr.rel (0) target = $region29
    $region28: #{tpu_custom_call.1} parent=1 // pred_region
      %43 = vsyncadd [#allocation7], 0
      %s44 = sshll.u32 %s6, 4
      %s45 = int_to_ptr.hbm [resolvable:$true] %s44
      %s46 = sshll.u32 [#allocation6], 4
      %s47 = int_to_ptr.vmem [resolvable:$true] %s46
      %52 = dma.hbm_to_vmem [thread:$0]  %s45, 4096, %s47, [#allocation7], 128, 128, 8
    $region29: #{tpu_custom_call.1} parent=1 // pred_fallthru
      _
    // Predicated region
    $region30: #{tpu_custom_call.1} parent=1 // pred_check
      _
    $region31: #{tpu_custom_call.1} parent=1 // pred_check_branch
      %54 = sbr.rel (0) target = $region33
    $region32: #{tpu_custom_call.1} parent=1 // pred_region
      _
    $region33: #{tpu_custom_call.1} parent=1 // pred_fallthru
      _
    // Predicated region
    $region34: #{tpu_custom_call.1} parent=1 // pred_check
      _
    $region35: #{tpu_custom_call.1} parent=1 // pred_check_branch
      %56 = sbr.rel (0) target = $region37
    $region36: #{tpu_custom_call.1} parent=1 // pred_region
      %58 = dma.done [#allocation4], 4096
    $region37: #{tpu_custom_call.1} parent=1 // pred_fallthru
      _
    // Predicated region
    $region38: #{tpu_custom_call.1} parent=1 // pred_check
      _
    $region39: #{tpu_custom_call.1} parent=1 // pred_check_branch
      %60 = sbr.rel (0) target = $region41
    $region40: #{tpu_custom_call.1} parent=1 // pred_region
      %62 = dma.done [#allocation7], 4096
    $region41: #{tpu_custom_call.1} parent=1 // pred_fallthru
      _
    %v64 = vld [vmem:[%s3] ss:$4 sm:$0x3]
    %s65 = scalar_lea.vmem %s3, 1
    %v66 = vld [vmem:[%s65] ss:$4 sm:$0x3]
    %s67 = scalar_lea.vmem %s3, 2
    %v68 = vld [vmem:[%s67] ss:$4 sm:$0x3]
    %v69 = vld [vmem:[%s3 + $0x3] sm:$0x1]
    %v70 = vld [vmem:[%s1] sm:$0xff]
    %v71 = vperm.slane %v70, 0
    %v72 = vsub.f32 %v70, %v71
    %vm73 = vcmask 261120
    %v74 = vsel %vm73, %v72, 0.0
    %v75 = vrot.slane %v74, 4
    %v76 = vadd.f32 %v74, %v75
    %v77 = vrot.slane %v76, 2
    %v78 = vadd.f32 %v76, %v77
    %v79 = vrot.slane %v78, 1
    %v80 = vadd.f32 %v78, %v79
    %v81 = vrcp.pop 8.0
    %v82 = vmul.f32 8.0, %v81
    %v83 = vsub.f32 1.0, %v82
    %v84 = vmul.f32 %v81, %v83
    %v85 = vadd.f32 %v81, %v84
    %vm86 = vweird.f32 %v81
    %v87 = vsel %vm86, %v81, %v85
    %v88 = vmul.f32 %v80, %v87
    %v89 = vmul.f32 %v72, %v72
    %v90 = vsel %vm73, %v89, 0.0
    %v91 = vrot.slane %v90, 4
    %v92 = vadd.f32 %v90, %v91
    %v93 = vrot.slane %v92, 2
    %v94 = vadd.f32 %v92, %v93
    %v95 = vrot.slane %v94, 1
    %v96 = vadd.f32 %v94, %v95
    %v97 = vmul.f32 %v96, %v87
    %v98 = vmul.f32 %v88, %v88
    %v99 = vsub.f32 %v97, %v98
    %v100 = vsub.f32 %v72, %v88
    %v101 = vadd.f32 %v99, 1e-05
    %v102 = vrsqrt.pop %v101
    %v103 = vmul.f32 %v102, %v101
    %v104 = vmul.f32 %v103, %v102
    %v105 = vmul.f32 0.5, %v104
    %v106 = vsub.f32 1.5, %v105
    %v107 = vmul.f32 %v102, %v106
    %vm108 = vweird.f32 %v101
    %vm109 = vweird.f32 %v102
    %vm110 = vmor %vm108, %vm109
    %v111 = vsel %vm110, %v102, %v107
    %v112 = vmul.f32 %v100, %v111
    %v113 = vpack.c.bf16 %v112, %v112
    %v114 = vld [vmem:[%s4] sm:$0xff]
    %v115 = vld [vmem:[%s4 + $0x8] sm:$0xff]
    %v116 = vld [vmem:[%s4 + $0x10] sm:$0xff]
    %v117 = vld [vmem:[%s4 + $0x18] sm:$0xff]
    %v119 = vperm.slane %v64, 0
    %v120 = vperm.slane %v64, 1
    %v127 = vunpack.c.l.b16 %v114
    %v128 = vunpack.c.h.b16 %v114
    %v129 = vunpack.c.l.b16 %v115
    %v130 = vunpack.c.h.b16 %v115
    %v131 = vunpack.c.l.b16 %v116
    %v132 = vunpack.c.h.b16 %v116
    %v133 = vunpack.c.l.b16 %v117
    %v134 = vunpack.c.h.b16 %v117
    %v135 = vpack.c.b16 %v129, %v127
    %v136 = vpack.c.b16 %v130, %v128
    %v137 = vpack.c.b16 %v133, %v131
    %v138 = vpack.c.b16 %v134, %v132
    %v144 = vsel %vm73, %v113, 0
    %146 = vmatpush.bf16.msra.mxu0 0
    %147 = vmatpush.bf16.msra.mxu0 0
    %148 = vmatpush.bf16.msra.mxu0 0
    %149 = vmatpush.bf16.msra.mxu0 0
    %150 = vmatpush.bf16.msra.mxu0 0
    %151 = vmatpush.bf16.msra.mxu0 0
    %152 = vmatpush.bf16.msra.mxu0 %v137
    %153 = vmatpush.bf16.msra.mxu0 %v135
    %154 = vmatmul.bf16.gmra.mxu0 %v144
    %v155 = vpop.f32.mrf.mxu0
    %v156 = vadd.f32 %v119, %v155
    %v157 = vpop.f32.mrf.mxu0
    %158 = vdwg.mxu0
    %159 = vmatpush.bf16.msra.mxu0 0
    %160 = vmatpush.bf16.msra.mxu0 0
    %161 = vmatpush.bf16.msra.mxu0 0
    %162 = vmatpush.bf16.msra.mxu0 0
    %163 = vmatpush.bf16.msra.mxu0 0
    %164 = vmatpush.bf16.msra.mxu0 0
    %165 = vmatpush.bf16.msra.mxu0 %v138
    %166 = vmatpush.bf16.msra.mxu0 %v136
    %167 = vmatmul.bf16.gmra.mxu0 %v144
    %v168 = vpop.f32.mrf.mxu0
    %v169 = vadd.f32 %v120, %v168
    %v170 = vpop.f32.mrf.mxu0
    %171 = vdwg.mxu0
    %v172 = vmax.f32 %v156, 0.0
    %v173 = vmax.f32 %v169, 0.0
    %v174 = vperm.slane %v172, 0
    %v175 = vperm.slane %v173, 0
    %v176 = vsub.f32 %v172, %v174
    %v177 = vsub.f32 %v173, %v175
    %v178 = vrot.slane %v176, 4
    %v179 = vadd.f32 %v176, %v178
    %v180 = vrot.slane %v179, 2
    %v181 = vadd.f32 %v179, %v180
    %v182 = vrot.slane %v181, 1
    %v183 = vadd.f32 %v181, %v182
    %v184 = vrot.slane %v177, 4
    %v185 = vadd.f32 %v177, %v184
    %v186 = vrot.slane %v185, 2
    %v187 = vadd.f32 %v185, %v186
    %v188 = vrot.slane %v187, 1
    %v189 = vadd.f32 %v187, %v188
    %v190 = vmul.f32 %v183, %v87
    %v191 = vmul.f32 %v189, %v87
    %v192 = vmul.f32 %v176, %v176
    %v193 = vmul.f32 %v177, %v177
    %v194 = vrot.slane %v192, 4
    %v195 = vadd.f32 %v192, %v194
    %v196 = vrot.slane %v195, 2
    %v197 = vadd.f32 %v195, %v196
    %v198 = vrot.slane %v197, 1
    %v199 = vadd.f32 %v197, %v198
    %v200 = vrot.slane %v193, 4
    %v201 = vadd.f32 %v193, %v200
    %v202 = vrot.slane %v201, 2
    %v203 = vadd.f32 %v201, %v202
    %v204 = vrot.slane %v203, 1
    %v205 = vadd.f32 %v203, %v204
    %v206 = vmul.f32 %v199, %v87
    %v207 = vmul.f32 %v205, %v87
    %v208 = vmul.f32 %v190, %v190
    %v209 = vmul.f32 %v191, %v191
    %v210 = vsub.f32 %v206, %v208
    %v211 = vsub.f32 %v207, %v209
    %v212 = vsub.f32 %v176, %v190
    %v213 = vsub.f32 %v177, %v191
    %v214 = vadd.f32 %v210, 1e-05
    %v215 = vadd.f32 %v211, 1e-05
    %v216 = vrsqrt.pop %v214
    %v217 = vmul.f32 %v216, %v214
    %v218 = vmul.f32 %v217, %v216
    %v219 = vmul.f32 0.5, %v218
    %v220 = vsub.f32 1.5, %v219
    %v221 = vmul.f32 %v216, %v220
    %vm222 = vweird.f32 %v214
    %vm223 = vweird.f32 %v216
    %vm224 = vmor %vm222, %vm223
    %v225 = vsel %vm224, %v216, %v221
    %v226 = vrsqrt.pop %v215
    %v227 = vmul.f32 %v226, %v215
    %v228 = vmul.f32 %v227, %v226
    %v229 = vmul.f32 0.5, %v228
    %v230 = vsub.f32 1.5, %v229
    %v231 = vmul.f32 %v226, %v230
    %vm232 = vweird.f32 %v215
    %vm233 = vweird.f32 %v226
    %vm234 = vmor %vm232, %vm233
    %v235 = vsel %vm234, %v226, %v231
    %v236 = vmul.f32 %v212, %v225
    %v237 = vmul.f32 %v213, %v235
    %v238 = vpack.c.bf16 %v236, %v236
    %v239 = vpack.c.bf16 %v237, %v237
    %v240 = vld [vmem:[#allocation3] sm:$0xff]
    %v241 = vld [vmem:[#allocation3 + $0x8] sm:$0xff]
    %v242 = vld [vmem:[#allocation3 + $0x10] sm:$0xff]
    %v243 = vld [vmem:[#allocation3 + $0x18] sm:$0xff]
    %v244 = vld [vmem:[#allocation3 + $0x20] sm:$0xff]
    %v245 = vld [vmem:[#allocation3 + $0x28] sm:$0xff]
    %v246 = vld [vmem:[#allocation3 + $0x30] sm:$0xff]
    %v247 = vld [vmem:[#allocation3 + $0x38] sm:$0xff]
    %v248 = vld [vmem:[#allocation3 + $0x40] sm:$0xff]
    %v249 = vld [vmem:[#allocation3 + $0x48] sm:$0xff]
    %v250 = vld [vmem:[#allocation3 + $0x50] sm:$0xff]
    %v251 = vld [vmem:[#allocation3 + $0x58] sm:$0xff]
    %v252 = vld [vmem:[#allocation3 + $0x60] sm:$0xff]
    %v253 = vld [vmem:[#allocation3 + $0x68] sm:$0xff]
    %v254 = vld [vmem:[#allocation3 + $0x70] sm:$0xff]
    %v255 = vld [vmem:[#allocation3 + $0x78] sm:$0xff]
    %v256 = vld [vmem:[#allocation3 + $0x80] sm:$0xff]
    %v257 = vld [vmem:[#allocation3 + $0x88] sm:$0xff]
    %v258 = vld [vmem:[#allocation3 + $0x90] sm:$0xff]
    %v259 = vld [vmem:[#allocation3 + $0x98] sm:$0xff]
    %v260 = vld [vmem:[#allocation3 + $0xa0] sm:$0xff]
    %v261 = vld [vmem:[#allocation3 + $0xa8] sm:$0xff]
    %v262 = vld [vmem:[#allocation3 + $0xb0] sm:$0xff]
    %v263 = vld [vmem:[#allocation3 + $0xb8] sm:$0xff]
    %v264 = vld [vmem:[#allocation3 + $0xc0] sm:$0xff]
    %v265 = vld [vmem:[#allocation3 + $0xc8] sm:$0xff]
    %v266 = vld [vmem:[#allocation3 + $0xd0] sm:$0xff]
    %v267 = vld [vmem:[#allocation3 + $0xd8] sm:$0xff]
    %v268 = vld [vmem:[#allocation3 + $0xe0] sm:$0xff]
    %v269 = vld [vmem:[#allocation3 + $0xe8] sm:$0xff]
    %v270 = vld [vmem:[#allocation3 + $0xf0] sm:$0xff]
    %v271 = vld [vmem:[#allocation3 + $0xf8] sm:$0xff]
    %v273 = vperm.slane %v66, 0
    %v274 = vperm.slane %v66, 1
    %v309 = vunpack.c.l.b16 %v240
    %v310 = vunpack.c.h.b16 %v240
    %v311 = vunpack.c.l.b16 %v241
    %v312 = vunpack.c.h.b16 %v241
    %v313 = vunpack.c.l.b16 %v242
    %v314 = vunpack.c.h.b16 %v242
    %v315 = vunpack.c.l.b16 %v243
    %v316 = vunpack.c.h.b16 %v243
    %v317 = vunpack.c.l.b16 %v244
    %v318 = vunpack.c.h.b16 %v244
    %v319 = vunpack.c.l.b16 %v245
    %v320 = vunpack.c.h.b16 %v245
    %v321 = vunpack.c.l.b16 %v246
    %v322 = vunpack.c.h.b16 %v246
    %v323 = vunpack.c.l.b16 %v247
    %v324 = vunpack.c.h.b16 %v247
    %v325 = vunpack.c.l.b16 %v248
    %v326 = vunpack.c.h.b16 %v248
    %v327 = vunpack.c.l.b16 %v249
    %v328 = vunpack.c.h.b16 %v249
    %v329 = vunpack.c.l.b16 %v250
    %v330 = vunpack.c.h.b16 %v250
    %v331 = vunpack.c.l.b16 %v251
    %v332 = vunpack.c.h.b16 %v251
    %v333 = vunpack.c.l.b16 %v252
    %v334 = vunpack.c.h.b16 %v252
    %v335 = vunpack.c.l.b16 %v253
    %v336 = vunpack.c.h.b16 %v253
    %v337 = vunpack.c.l.b16 %v254
    %v338 = vunpack.c.h.b16 %v254
    %v339 = vunpack.c.l.b16 %v255
    %v340 = vunpack.c.h.b16 %v255
    %v341 = vunpack.c.l.b16 %v256
    %v342 = vunpack.c.h.b16 %v256
    %v343 = vunpack.c.l.b16 %v257
    %v344 = vunpack.c.h.b16 %v257
    %v345 = vunpack.c.l.b16 %v258
    %v346 = vunpack.c.h.b16 %v258
    %v347 = vunpack.c.l.b16 %v259
    %v348 = vunpack.c.h.b16 %v259
    %v349 = vunpack.c.l.b16 %v260
    %v350 = vunpack.c.h.b16 %v260
    %v351 = vunpack.c.l.b16 %v261
    %v352 = vunpack.c.h.b16 %v261
    %v353 = vunpack.c.l.b16 %v262
    %v354 = vunpack.c.h.b16 %v262
    %v355 = vunpack.c.l.b16 %v263
    %v356 = vunpack.c.h.b16 %v263
    %v357 = vunpack.c.l.b16 %v264
    %v358 = vunpack.c.h.b16 %v264
    %v359 = vunpack.c.l.b16 %v265
    %v360 = vunpack.c.h.b16 %v265
    %v361 = vunpack.c.l.b16 %v266
    %v362 = vunpack.c.h.b16 %v266
    %v363 = vunpack.c.l.b16 %v267
    %v364 = vunpack.c.h.b16 %v267
    %v365 = vunpack.c.l.b16 %v268
    %v366 = vunpack.c.h.b16 %v268
    %v367 = vunpack.c.l.b16 %v269
    %v368 = vunpack.c.h.b16 %v269
    %v369 = vunpack.c.l.b16 %v270
    %v370 = vunpack.c.h.b16 %v270
    %v371 = vunpack.c.l.b16 %v271
    %v372 = vunpack.c.h.b16 %v271
    %v373 = vpack.c.b16 %v311, %v309
    %v374 = vpack.c.b16 %v312, %v310
    %v375 = vpack.c.b16 %v315, %v313
    %v376 = vpack.c.b16 %v316, %v314
    %v377 = vpack.c.b16 %v319, %v317
    %v378 = vpack.c.b16 %v320, %v318
    %v379 = vpack.c.b16 %v323, %v321
    %v380 = vpack.c.b16 %v324, %v322
    %v381 = vpack.c.b16 %v327, %v325
    %v382 = vpack.c.b16 %v328, %v326
    %v383 = vpack.c.b16 %v331, %v329
    %v384 = vpack.c.b16 %v332, %v330
    %v385 = vpack.c.b16 %v335, %v333
    %v386 = vpack.c.b16 %v336, %v334
    %v387 = vpack.c.b16 %v339, %v337
    %v388 = vpack.c.b16 %v340, %v338
    %v389 = vpack.c.b16 %v343, %v341
    %v390 = vpack.c.b16 %v344, %v342
    %v391 = vpack.c.b16 %v347, %v345
    %v392 = vpack.c.b16 %v348, %v346
    %v393 = vpack.c.b16 %v351, %v349
    %v394 = vpack.c.b16 %v352, %v350
    %v395 = vpack.c.b16 %v355, %v353
    %v396 = vpack.c.b16 %v356, %v354
    %v397 = vpack.c.b16 %v359, %v357
    %v398 = vpack.c.b16 %v360, %v358
    %v399 = vpack.c.b16 %v363, %v361
    %v400 = vpack.c.b16 %v364, %v362
    %v401 = vpack.c.b16 %v367, %v365
    %v402 = vpack.c.b16 %v368, %v366
    %v403 = vpack.c.b16 %v371, %v369
    %v404 = vpack.c.b16 %v372, %v370
    %437 = vmatpush.bf16.msra.mxu0 %v387
    %438 = vmatpush.bf16.msra.mxu0 %v385
    %439 = vmatpush.bf16.msra.mxu0 %v383
    %440 = vmatpush.bf16.msra.mxu0 %v381
    %441 = vmatpush.bf16.msra.mxu0 %v379
    %442 = vmatpush.bf16.msra.mxu0 %v377
    %443 = vmatpush.bf16.msra.mxu0 %v375
    %444 = vmatpush.bf16.msra.mxu0 %v373
    %445 = vmatmul.bf16.gmra.mxu0 %v238
    %v446 = vpop.f32.mrf.mxu0
    %v447 = vadd.f32 %v273, %v446
    %v448 = vpop.f32.mrf.mxu0
    %449 = vdwg.mxu0
    %450 = vmatpush.bf16.msra.mxu0 %v403
    %451 = vmatpush.bf16.msra.mxu0 %v401
    %452 = vmatpush.bf16.msra.mxu0 %v399
    %453 = vmatpush.bf16.msra.mxu0 %v397
    %454 = vmatpush.bf16.msra.mxu0 %v395
    %455 = vmatpush.bf16.msra.mxu0 %v393
    %456 = vmatpush.bf16.msra.mxu0 %v391
    %457 = vmatpush.bf16.msra.mxu0 %v389
    %458 = vmatmul.bf16.gmra.mxu0 %v239
    %v459 = vpop.f32.mrf.mxu0
    %v460 = vadd.f32 %v447, %v459
    %v461 = vpop.f32.mrf.mxu0
    %462 = vdwg.mxu0
    %463 = vmatpush.bf16.msra.mxu0 %v388
    %464 = vmatpush.bf16.msra.mxu0 %v386
    %465 = vmatpush.bf16.msra.mxu0 %v384
    %466 = vmatpush.bf16.msra.mxu0 %v382
    %467 = vmatpush.bf16.msra.mxu0 %v380
    %468 = vmatpush.bf16.msra.mxu0 %v378
    %469 = vmatpush.bf16.msra.mxu0 %v376
    %470 = vmatpush.bf16.msra.mxu0 %v374
    %471 = vmatmul.bf16.gmra.mxu0 %v238
    %v472 = vpop.f32.mrf.mxu0
    %v473 = vadd.f32 %v274, %v472
    %v474 = vpop.f32.mrf.mxu0
    %475 = vdwg.mxu0
    %476 = vmatpush.bf16.msra.mxu0 %v404
    %477 = vmatpush.bf16.msra.mxu0 %v402
    %478 = vmatpush.bf16.msra.mxu0 %v400
    %479 = vmatpush.bf16.msra.mxu0 %v398
    %480 = vmatpush.bf16.msra.mxu0 %v396
    %481 = vmatpush.bf16.msra.mxu0 %v394
    %482 = vmatpush.bf16.msra.mxu0 %v392
    %483 = vmatpush.bf16.msra.mxu0 %v390
    %484 = vmatmul.bf16.gmra.mxu0 %v239
    %v485 = vpop.f32.mrf.mxu0
    %v486 = vadd.f32 %v473, %v485
    %v487 = vpop.f32.mrf.mxu0
    %488 = vdwg.mxu0
    %v489 = vmax.f32 %v460, 0.0
    %v490 = vmax.f32 %v486, 0.0
    %v491 = vperm.slane %v489, 0
    %v492 = vperm.slane %v490, 0
    %v493 = vsub.f32 %v489, %v491
    %v494 = vsub.f32 %v490, %v492
    %v495 = vrot.slane %v493, 4
    %v496 = vadd.f32 %v493, %v495
    %v497 = vrot.slane %v496, 2
    %v498 = vadd.f32 %v496, %v497
    %v499 = vrot.slane %v498, 1
    %v500 = vadd.f32 %v498, %v499
    %v501 = vrot.slane %v494, 4
    %v502 = vadd.f32 %v494, %v501
    %v503 = vrot.slane %v502, 2
    %v504 = vadd.f32 %v502, %v503
    %v505 = vrot.slane %v504, 1
    %v506 = vadd.f32 %v504, %v505
    %v507 = vmul.f32 %v500, %v87
    %v508 = vmul.f32 %v506, %v87
    %v509 = vmul.f32 %v493, %v493
    %v510 = vmul.f32 %v494, %v494
    %v511 = vrot.slane %v509, 4
    %v512 = vadd.f32 %v509, %v511
    %v513 = vrot.slane %v512, 2
    %v514 = vadd.f32 %v512, %v513
    %v515 = vrot.slane %v514, 1
    %v516 = vadd.f32 %v514, %v515
    %v517 = vrot.slane %v510, 4
    %v518 = vadd.f32 %v510, %v517
    %v519 = vrot.slane %v518, 2
    %v520 = vadd.f32 %v518, %v519
    %v521 = vrot.slane %v520, 1
    %v522 = vadd.f32 %v520, %v521
    %v523 = vmul.f32 %v516, %v87
    %v524 = vmul.f32 %v522, %v87
    %v525 = vmul.f32 %v507, %v507
    %v526 = vmul.f32 %v508, %v508
    %v527 = vsub.f32 %v523, %v525
    %v528 = vsub.f32 %v524, %v526
    %v529 = vsub.f32 %v493, %v507
    %v530 = vsub.f32 %v494, %v508
    %v531 = vadd.f32 %v527, 1e-05
    %v532 = vadd.f32 %v528, 1e-05
    %v533 = vrsqrt.pop %v531
    %v534 = vmul.f32 %v533, %v531
    %v535 = vmul.f32 %v534, %v533
    %v536 = vmul.f32 0.5, %v535
    %v537 = vsub.f32 1.5, %v536
    %v538 = vmul.f32 %v533, %v537
    %vm539 = vweird.f32 %v531
    %vm540 = vweird.f32 %v533
    %vm541 = vmor %vm539, %vm540
    %v542 = vsel %vm541, %v533, %v538
    %v543 = vrsqrt.pop %v532
    %v544 = vmul.f32 %v543, %v532
    %v545 = vmul.f32 %v544, %v543
    %v546 = vmul.f32 0.5, %v545
    %v547 = vsub.f32 1.5, %v546
    %v548 = vmul.f32 %v543, %v547
    %vm549 = vweird.f32 %v532
    %vm550 = vweird.f32 %v543
    %vm551 = vmor %vm549, %vm550
    %v552 = vsel %vm551, %v543, %v548
    %v553 = vmul.f32 %v529, %v542
    %v554 = vmul.f32 %v530, %v552
    %v555 = vpack.c.bf16 %v553, %v553
    %v556 = vpack.c.bf16 %v554, %v554
    %v557 = vld [vmem:[#allocation6] sm:$0xff]
    %v558 = vld [vmem:[#allocation6 + $0x8] sm:$0xff]
    %v559 = vld [vmem:[#allocation6 + $0x10] sm:$0xff]
    %v560 = vld [vmem:[#allocation6 + $0x18] sm:$0xff]
    %v561 = vld [vmem:[#allocation6 + $0x20] sm:$0xff]
    %v562 = vld [vmem:[#allocation6 + $0x28] sm:$0xff]
    %v563 = vld [vmem:[#allocation6 + $0x30] sm:$0xff]
    %v564 = vld [vmem:[#allocation6 + $0x38] sm:$0xff]
    %v565 = vld [vmem:[#allocation6 + $0x40] sm:$0xff]
    %v566 = vld [vmem:[#allocation6 + $0x48] sm:$0xff]
    %v567 = vld [vmem:[#allocation6 + $0x50] sm:$0xff]
    %v568 = vld [vmem:[#allocation6 + $0x58] sm:$0xff]
    %v569 = vld [vmem:[#allocation6 + $0x60] sm:$0xff]
    %v570 = vld [vmem:[#allocation6 + $0x68] sm:$0xff]
    %v571 = vld [vmem:[#allocation6 + $0x70] sm:$0xff]
    %v572 = vld [vmem:[#allocation6 + $0x78] sm:$0xff]
    %v573 = vld [vmem:[#allocation6 + $0x80] sm:$0xff]
    %v574 = vld [vmem:[#allocation6 + $0x88] sm:$0xff]
    %v575 = vld [vmem:[#allocation6 + $0x90] sm:$0xff]
    %v576 = vld [vmem:[#allocation6 + $0x98] sm:$0xff]
    %v577 = vld [vmem:[#allocation6 + $0xa0] sm:$0xff]
    %v578 = vld [vmem:[#allocation6 + $0xa8] sm:$0xff]
    %v579 = vld [vmem:[#allocation6 + $0xb0] sm:$0xff]
    %v580 = vld [vmem:[#allocation6 + $0xb8] sm:$0xff]
    %v581 = vld [vmem:[#allocation6 + $0xc0] sm:$0xff]
    %v582 = vld [vmem:[#allocation6 + $0xc8] sm:$0xff]
    %v583 = vld [vmem:[#allocation6 + $0xd0] sm:$0xff]
    %v584 = vld [vmem:[#allocation6 + $0xd8] sm:$0xff]
    %v585 = vld [vmem:[#allocation6 + $0xe0] sm:$0xff]
    %v586 = vld [vmem:[#allocation6 + $0xe8] sm:$0xff]
    %v587 = vld [vmem:[#allocation6 + $0xf0] sm:$0xff]
    %v588 = vld [vmem:[#allocation6 + $0xf8] sm:$0xff]
    %v590 = vperm.slane %v68, 0
    %v591 = vperm.slane %v68, 1
    %v626 = vunpack.c.l.b16 %v557
    %v627 = vunpack.c.h.b16 %v557
    %v628 = vunpack.c.l.b16 %v558
    %v629 = vunpack.c.h.b16 %v558
    %v630 = vunpack.c.l.b16 %v559
    %v631 = vunpack.c.h.b16 %v559
    %v632 = vunpack.c.l.b16 %v560
    %v633 = vunpack.c.h.b16 %v560
    %v634 = vunpack.c.l.b16 %v561
    %v635 = vunpack.c.h.b16 %v561
    %v636 = vunpack.c.l.b16 %v562
    %v637 = vunpack.c.h.b16 %v562
    %v638 = vunpack.c.l.b16 %v563
    %v639 = vunpack.c.h.b16 %v563
    %v640 = vunpack.c.l.b16 %v564
    %v641 = vunpack.c.h.b16 %v564
    %v642 = vunpack.c.l.b16 %v565
    %v643 = vunpack.c.h.b16 %v565
    %v644 = vunpack.c.l.b16 %v566
    %v645 = vunpack.c.h.b16 %v566
    %v646 = vunpack.c.l.b16 %v567
    %v647 = vunpack.c.h.b16 %v567
    %v648 = vunpack.c.l.b16 %v568
    %v649 = vunpack.c.h.b16 %v568
    %v650 = vunpack.c.l.b16 %v569
    %v651 = vunpack.c.h.b16 %v569
    %v652 = vunpack.c.l.b16 %v570
    %v653 = vunpack.c.h.b16 %v570
    %v654 = vunpack.c.l.b16 %v571
    %v655 = vunpack.c.h.b16 %v571
    %v656 = vunpack.c.l.b16 %v572
    %v657 = vunpack.c.h.b16 %v572
    %v658 = vunpack.c.l.b16 %v573
    %v659 = vunpack.c.h.b16 %v573
    %v660 = vunpack.c.l.b16 %v574
    %v661 = vunpack.c.h.b16 %v574
    %v662 = vunpack.c.l.b16 %v575
    %v663 = vunpack.c.h.b16 %v575
    %v664 = vunpack.c.l.b16 %v576
    %v665 = vunpack.c.h.b16 %v576
    %v666 = vunpack.c.l.b16 %v577
    %v667 = vunpack.c.h.b16 %v577
    %v668 = vunpack.c.l.b16 %v578
    %v669 = vunpack.c.h.b16 %v578
    %v670 = vunpack.c.l.b16 %v579
    %v671 = vunpack.c.h.b16 %v579
    %v672 = vunpack.c.l.b16 %v580
    %v673 = vunpack.c.h.b16 %v580
    %v674 = vunpack.c.l.b16 %v581
    %v675 = vunpack.c.h.b16 %v581
    %v676 = vunpack.c.l.b16 %v582
    %v677 = vunpack.c.h.b16 %v582
    %v678 = vunpack.c.l.b16 %v583
    %v679 = vunpack.c.h.b16 %v583
    %v680 = vunpack.c.l.b16 %v584
    %v681 = vunpack.c.h.b16 %v584
    %v682 = vunpack.c.l.b16 %v585
    %v683 = vunpack.c.h.b16 %v585
    %v684 = vunpack.c.l.b16 %v586
    %v685 = vunpack.c.h.b16 %v586
    %v686 = vunpack.c.l.b16 %v587
    %v687 = vunpack.c.h.b16 %v587
    %v688 = vunpack.c.l.b16 %v588
    %v689 = vunpack.c.h.b16 %v588
    %v690 = vpack.c.b16 %v628, %v626
    %v691 = vpack.c.b16 %v629, %v627
    %v692 = vpack.c.b16 %v632, %v630
    %v693 = vpack.c.b16 %v633, %v631
    %v694 = vpack.c.b16 %v636, %v634
    %v695 = vpack.c.b16 %v637, %v635
    %v696 = vpack.c.b16 %v640, %v638
    %v697 = vpack.c.b16 %v641, %v639
    %v698 = vpack.c.b16 %v644, %v642
    %v699 = vpack.c.b16 %v645, %v643
    %v700 = vpack.c.b16 %v648, %v646
    %v701 = vpack.c.b16 %v649, %v647
    %v702 = vpack.c.b16 %v652, %v650
    %v703 = vpack.c.b16 %v653, %v651
    %v704 = vpack.c.b16 %v656, %v654
    %v705 = vpack.c.b16 %v657, %v655
    %v706 = vpack.c.b16 %v660, %v658
    %v707 = vpack.c.b16 %v661, %v659
    %v708 = vpack.c.b16 %v664, %v662
    %v709 = vpack.c.b16 %v665, %v663
    %v710 = vpack.c.b16 %v668, %v666
    %v711 = vpack.c.b16 %v669, %v667
    %v712 = vpack.c.b16 %v672, %v670
    %v713 = vpack.c.b16 %v673, %v671
    %v714 = vpack.c.b16 %v676, %v674
    %v715 = vpack.c.b16 %v677, %v675
    %v716 = vpack.c.b16 %v680, %v678
    %v717 = vpack.c.b16 %v681, %v679
    %v718 = vpack.c.b16 %v684, %v682
    %v719 = vpack.c.b16 %v685, %v683
    %v720 = vpack.c.b16 %v688, %v686
    %v721 = vpack.c.b16 %v689, %v687
    %754 = vmatpush.bf16.msra.mxu0 %v704
    %755 = vmatpush.bf16.msra.mxu0 %v702
    %756 = vmatpush.bf16.msra.mxu0 %v700
    %757 = vmatpush.bf16.msra.mxu0 %v698
    %758 = vmatpush.bf16.msra.mxu0 %v696
    %759 = vmatpush.bf16.msra.mxu0 %v694
    %760 = vmatpush.bf16.msra.mxu0 %v692
    %761 = vmatpush.bf16.msra.mxu0 %v690
    %762 = vmatmul.bf16.gmra.mxu0 %v555
    %v763 = vpop.f32.mrf.mxu0
    %v764 = vadd.f32 %v590, %v763
    %v765 = vpop.f32.mrf.mxu0
    %766 = vdwg.mxu0
    %767 = vmatpush.bf16.msra.mxu0 %v720
    %768 = vmatpush.bf16.msra.mxu0 %v718
    %769 = vmatpush.bf16.msra.mxu0 %v716
    %770 = vmatpush.bf16.msra.mxu0 %v714
    %771 = vmatpush.bf16.msra.mxu0 %v712
    %772 = vmatpush.bf16.msra.mxu0 %v710
    %773 = vmatpush.bf16.msra.mxu0 %v708
    %774 = vmatpush.bf16.msra.mxu0 %v706
    %775 = vmatmul.bf16.gmra.mxu0 %v556
    %v776 = vpop.f32.mrf.mxu0
    %v777 = vadd.f32 %v764, %v776
    %v778 = vpop.f32.mrf.mxu0
    %779 = vdwg.mxu0
    %780 = vmatpush.bf16.msra.mxu0 %v705
    %781 = vmatpush.bf16.msra.mxu0 %v703
    %782 = vmatpush.bf16.msra.mxu0 %v701
    %783 = vmatpush.bf16.msra.mxu0 %v699
    %784 = vmatpush.bf16.msra.mxu0 %v697
    %785 = vmatpush.bf16.msra.mxu0 %v695
    %786 = vmatpush.bf16.msra.mxu0 %v693
    %787 = vmatpush.bf16.msra.mxu0 %v691
    %788 = vmatmul.bf16.gmra.mxu0 %v555
    %v789 = vpop.f32.mrf.mxu0
    %v790 = vadd.f32 %v591, %v789
    %v791 = vpop.f32.mrf.mxu0
    %792 = vdwg.mxu0
    %793 = vmatpush.bf16.msra.mxu0 %v721
    %794 = vmatpush.bf16.msra.mxu0 %v719
    %795 = vmatpush.bf16.msra.mxu0 %v717
    %796 = vmatpush.bf16.msra.mxu0 %v715
    %797 = vmatpush.bf16.msra.mxu0 %v713
    %798 = vmatpush.bf16.msra.mxu0 %v711
    %799 = vmatpush.bf16.msra.mxu0 %v709
    %800 = vmatpush.bf16.msra.mxu0 %v707
    %801 = vmatmul.bf16.gmra.mxu0 %v556
    %v802 = vpop.f32.mrf.mxu0
    %v803 = vadd.f32 %v790, %v802
    %v804 = vpop.f32.mrf.mxu0
    %805 = vdwg.mxu0
    %v806 = vmax.f32 %v777, 0.0
    %v807 = vmax.f32 %v803, 0.0
    %v808 = vperm.slane %v806, 0
    %v809 = vperm.slane %v807, 0
    %v810 = vsub.f32 %v806, %v808
    %v811 = vsub.f32 %v807, %v809
    %v812 = vrot.slane %v810, 4
    %v813 = vadd.f32 %v810, %v812
    %v814 = vrot.slane %v813, 2
    %v815 = vadd.f32 %v813, %v814
    %v816 = vrot.slane %v815, 1
    %v817 = vadd.f32 %v815, %v816
    %v818 = vrot.slane %v811, 4
    %v819 = vadd.f32 %v811, %v818
    %v820 = vrot.slane %v819, 2
    %v821 = vadd.f32 %v819, %v820
    %v822 = vrot.slane %v821, 1
    %v823 = vadd.f32 %v821, %v822
    %v824 = vmul.f32 %v817, %v87
    %v825 = vmul.f32 %v823, %v87
    %v826 = vmul.f32 %v810, %v810
    %v827 = vmul.f32 %v811, %v811
    %v828 = vrot.slane %v826, 4
    %v829 = vadd.f32 %v826, %v828
    %v830 = vrot.slane %v829, 2
    %v831 = vadd.f32 %v829, %v830
    %v832 = vrot.slane %v831, 1
    %v833 = vadd.f32 %v831, %v832
    %v834 = vrot.slane %v827, 4
    %v835 = vadd.f32 %v827, %v834
    %v836 = vrot.slane %v835, 2
    %v837 = vadd.f32 %v835, %v836
    %v838 = vrot.slane %v837, 1
    %v839 = vadd.f32 %v837, %v838
    %v840 = vmul.f32 %v833, %v87
    %v841 = vmul.f32 %v839, %v87
    %v842 = vmul.f32 %v824, %v824
    %v843 = vmul.f32 %v825, %v825
    %v844 = vsub.f32 %v840, %v842
    %v845 = vsub.f32 %v841, %v843
    %v846 = vsub.f32 %v810, %v824
    %v847 = vsub.f32 %v811, %v825
    %v848 = vadd.f32 %v844, 1e-05
    %v849 = vadd.f32 %v845, 1e-05
    %v850 = vrsqrt.pop %v848
    %v851 = vmul.f32 %v850, %v848
    %v852 = vmul.f32 %v851, %v850
    %v853 = vmul.f32 0.5, %v852
    %v854 = vsub.f32 1.5, %v853
    %v855 = vmul.f32 %v850, %v854
    %vm856 = vweird.f32 %v848
    %vm857 = vweird.f32 %v850
    %vm858 = vmor %vm856, %vm857
    %v859 = vsel %vm858, %v850, %v855
    %v860 = vrsqrt.pop %v849
    %v861 = vmul.f32 %v860, %v849
    %v862 = vmul.f32 %v861, %v860
    %v863 = vmul.f32 0.5, %v862
    %v864 = vsub.f32 1.5, %v863
    %v865 = vmul.f32 %v860, %v864
    %vm866 = vweird.f32 %v849
    %vm867 = vweird.f32 %v860
    %vm868 = vmor %vm866, %vm867
    %v869 = vsel %vm868, %v860, %v865
    %v870 = vmul.f32 %v846, %v859
    %v871 = vmul.f32 %v847, %v869
    %v872 = vpack.c.bf16 %v870, %v870
    %v873 = vpack.c.bf16 %v871, %v871
    %v874 = vld [vmem:[%s7] sm:$0xf]
    %v875 = vld [vmem:[%s7 + $0x4] sm:$0xf]
    %v876 = vld [vmem:[%s7 + $0x8] sm:$0xf]
    %v877 = vld [vmem:[%s7 + $0xc] sm:$0xf]
    %v878 = vld [vmem:[%s7 + $0x10] sm:$0xf]
    %v879 = vld [vmem:[%s7 + $0x14] sm:$0xf]
    %v880 = vld [vmem:[%s7 + $0x18] sm:$0xf]
    %v881 = vld [vmem:[%s7 + $0x1c] sm:$0xf]
    %v882 = vld [vmem:[%s7 + $0x20] sm:$0xf]
    %v883 = vld [vmem:[%s7 + $0x24] sm:$0xf]
    %v884 = vld [vmem:[%s7 + $0x28] sm:$0xf]
    %v885 = vld [vmem:[%s7 + $0x2c] sm:$0xf]
    %v886 = vld [vmem:[%s7 + $0x30] sm:$0xf]
    %v887 = vld [vmem:[%s7 + $0x34] sm:$0xf]
    %v888 = vld [vmem:[%s7 + $0x38] sm:$0xf]
    %v889 = vld [vmem:[%s7 + $0x3c] sm:$0xf]
    %v890 = vld [vmem:[%s7 + $0x40] sm:$0xf]
    %v891 = vld [vmem:[%s7 + $0x44] sm:$0xf]
    %v892 = vld [vmem:[%s7 + $0x48] sm:$0xf]
    %v893 = vld [vmem:[%s7 + $0x4c] sm:$0xf]
    %v894 = vld [vmem:[%s7 + $0x50] sm:$0xf]
    %v895 = vld [vmem:[%s7 + $0x54] sm:$0xf]
    %v896 = vld [vmem:[%s7 + $0x58] sm:$0xf]
    %v897 = vld [vmem:[%s7 + $0x5c] sm:$0xf]
    %v898 = vld [vmem:[%s7 + $0x60] sm:$0xf]
    %v899 = vld [vmem:[%s7 + $0x64] sm:$0xf]
    %v900 = vld [vmem:[%s7 + $0x68] sm:$0xf]
    %v901 = vld [vmem:[%s7 + $0x6c] sm:$0xf]
    %v902 = vld [vmem:[%s7 + $0x70] sm:$0xf]
    %v903 = vld [vmem:[%s7 + $0x74] sm:$0xf]
    %v904 = vld [vmem:[%s7 + $0x78] sm:$0xf]
    %v905 = vld [vmem:[%s7 + $0x7c] sm:$0xf]
    %v906 = vperm.slane %v69, 0
    %v939 = vunpack.c.l.b16 %v874
    %v940 = vunpack.c.l.b16 %v875
    %v941 = vunpack.c.l.b16 %v876
    %v942 = vunpack.c.l.b16 %v877
    %v943 = vunpack.c.l.b16 %v878
    %v944 = vunpack.c.l.b16 %v879
    %v945 = vunpack.c.l.b16 %v880
    %v946 = vunpack.c.l.b16 %v881
    %v947 = vunpack.c.l.b16 %v882
    %v948 = vunpack.c.l.b16 %v883
    %v949 = vunpack.c.l.b16 %v884
    %v950 = vunpack.c.l.b16 %v885
    %v951 = vunpack.c.l.b16 %v886
    %v952 = vunpack.c.l.b16 %v887
    %v953 = vunpack.c.l.b16 %v888
    %v954 = vunpack.c.l.b16 %v889
    %v955 = vunpack.c.l.b16 %v890
    %v956 = vunpack.c.l.b16 %v891
    %v957 = vunpack.c.l.b16 %v892
    %v958 = vunpack.c.l.b16 %v893
    %v959 = vunpack.c.l.b16 %v894
    %v960 = vunpack.c.l.b16 %v895
    %v961 = vunpack.c.l.b16 %v896
    %v962 = vunpack.c.l.b16 %v897
    %v963 = vunpack.c.l.b16 %v898
    %v964 = vunpack.c.l.b16 %v899
    %v965 = vunpack.c.l.b16 %v900
    %v966 = vunpack.c.l.b16 %v901
    %v967 = vunpack.c.l.b16 %v902
    %v968 = vunpack.c.l.b16 %v903
    %v969 = vunpack.c.l.b16 %v904
    %v970 = vunpack.c.l.b16 %v905
    %v971 = vpack.c.b16 %v940, %v939
    %v972 = vpack.c.b16 %v942, %v941
    %v973 = vpack.c.b16 %v944, %v943
    %v974 = vpack.c.b16 %v946, %v945
    %v975 = vpack.c.b16 %v948, %v947
    %v976 = vpack.c.b16 %v950, %v949
    %v977 = vpack.c.b16 %v952, %v951
    %v978 = vpack.c.b16 %v954, %v953
    %v979 = vpack.c.b16 %v956, %v955
    %v980 = vpack.c.b16 %v958, %v957
    %v981 = vpack.c.b16 %v960, %v959
    %v982 = vpack.c.b16 %v962, %v961
    %v983 = vpack.c.b16 %v964, %v963
    %v984 = vpack.c.b16 %v966, %v965
    %v985 = vpack.c.b16 %v968, %v967
    %v986 = vpack.c.b16 %v970, %v969
    %1003 = vmatpush.bf16.msra.mxu0 %v978
    %1004 = vmatpush.bf16.msra.mxu0 %v977
    %1005 = vmatpush.bf16.msra.mxu0 %v976
    %1006 = vmatpush.bf16.msra.mxu0 %v975
    %1007 = vmatpush.bf16.msra.mxu0 %v974
    %1008 = vmatpush.bf16.msra.mxu0 %v973
    %1009 = vmatpush.bf16.msra.mxu0 %v972
    %1010 = vmatpush.bf16.msra.mxu0 %v971
    %1011 = vmatmul.bf16.gmra.mxu0 %v872
    %v1012 = vpop.f32.mrf.mxu0
    %v1013 = vadd.f32 %v906, %v1012
    %v1014 = vpop.f32.mrf.mxu0
    %1015 = vdwg.mxu0
    %1016 = vmatpush.bf16.msra.mxu0 %v986
    %1017 = vmatpush.bf16.msra.mxu0 %v985
    %1018 = vmatpush.bf16.msra.mxu0 %v984
    %1019 = vmatpush.bf16.msra.mxu0 %v983
    %1020 = vmatpush.bf16.msra.mxu0 %v982
    %1021 = vmatpush.bf16.msra.mxu0 %v981
    %1022 = vmatpush.bf16.msra.mxu0 %v980
    %1023 = vmatpush.bf16.msra.mxu0 %v979
    %1024 = vmatmul.bf16.gmra.mxu0 %v873
    %v1025 = vpop.f32.mrf.mxu0
    %v1026 = vadd.f32 %v1013, %v1025
    %v1027 = vpop.f32.mrf.mxu0
    %1028 = vdwg.mxu0
    %v1029 = vtanh.pop %v1026
    %v1030 = vld [vmem:[%s2 + $0x8] sm:$0x1]
    %v1031 = vld [vmem:[%s2] sm:$0xff]
    %s1032 = sld [smem:[#allocation2]]
    %p1033 = scmp.eq.s32.totalorder %s1032, 1
    %s1034 = scalar_select %p1033, 1, 0
    %s1035 = scvt.s32.f32 %s1034
    %v1036 = vperm.slane %v1030, 0
    %v1037 = vmul.f32 %v1036, %v1031
    %v1038 = vadd.f32 %v1029, %v1037
    %v1039 = vsub.f32 %v1038, %v1031
    %v1040 = vstv %s1035
    %v1041 = vmul.f32 %v1040, %v1039
    %v1042 = vadd.f32 %v1031, %v1041
    %v1043 = vsub.f32 %v1042, %v1029
    %v1044 = vmul.f32 %v1030, %v1030
    %v1045 = vrcp.pop %v1044
    %v1046 = vmul.f32 %v1045, 0.5
    %v1047 = vmul.f32 %v1043, %v1043
    %v1048 = vsub.f32 0.0, %v1047
    %v1049 = vperm.slane %v1046, 0
    %v1050 = vmul.f32 %v1048, %v1049
    %v1051 = vlog2.pop %v1030
    %v1052 = vmul.f32 %v1051, 0.6931472
    %v1053 = vperm.slane %v1052, 0
    %v1054 = vsub.f32 %v1050, %v1053
    %v1055 = vsub.f32 %v1054, 0.9189385
    %vm1056 = vcmask 64512
    %v1057 = vsel %vm1056, %v1055, 0.0
    %1058 = vadd.xlane.f32.xlu0 %v1057
    %v1059 = vpop.xlane.xlu0 %1058
    %1060 = vst [vmem:[#allocation8] sm:$0xff] 0.0
    %1061 = vst.msk [vmem:[#allocation8] sm:$0xff] %vm1056, %v1042
    %vm1062 = vcmask 72768
    %1063 = vst.msk [vmem:[#allocation8] sm:$0xff] %vm1062, %v1029
    %vm1064 = vcmask 80968
    %1065 = vst.msk [vmem:[#allocation8] sm:$0xff] %vm1064, %v1059
    // Predicated region
    $region42: #{tpu_custom_call.1} parent=1 // pred_check
      _
    $region43: #{tpu_custom_call.1} parent=1 // pred_check_branch
      %1067 = sbr.rel (0) target = $region45
    $region44: #{tpu_custom_call.1} parent=1 // pred_region
      %1069 = vsyncadd [#allocation5], 0
      %s1071 = sshll.u32 [#allocation8], 4
      %s1072 = int_to_ptr.vmem [resolvable:$true] %s1071
      %s1073 = sshll.u32 %s8, 4
      %s1074 = int_to_ptr.hbm [resolvable:$true] %s1073
      %1076 = dma.vmem_to_hbm [thread:$0]  %s1072, 128, %s1074, [#allocation5]
    $region45: #{tpu_custom_call.1} parent=1 // pred_fallthru
      _
    // Predicated region
    $region46: #{tpu_custom_call.1} parent=1 // pred_check
      _
    $region47: #{tpu_custom_call.1} parent=1 // pred_check_branch
      %1078 = sbr.rel (0) target = $region49
    $region48: #{tpu_custom_call.1} parent=1 // pred_region
      %1080 = dma.done [#allocation5], 128
    $region49: #{tpu_custom_call.1} parent=1 // pred_fallthru
      _
    %1081 = vsyncpa [#allocation4], 1
    %1082 = vsyncpa [#allocation7], 1
    %1083 = vsyncpa [#allocation5], 1

</llo_original>
